<compile_context>
chip_gen: v5e
topology: v5e:2x2
jax: 0.10.0
libtpu: 0.0.40
codegen_flags: <defaults>
</compile_context>

<pallas_src>
import functools

import jax
import jax.numpy as jnp
from jax.experimental import pallas as pl
from jax.experimental.pallas import tpu as pltpu


def _ohkm_mse_kernel(*refs, topk, hw, thw, use_target_weight):
    """Grid = (batch_blocks, hw_chunks); acc_ref is a (tb, J, 128) f32 lane acc."""
    if use_target_weight:
        pred_ref, tgt_ref, w_ref, out_ref, acc_ref = refs
    else:
        pred_ref, tgt_ref, out_ref, acc_ref = refs
        w_ref = None

    k = pl.program_id(1)

    @pl.when(k == 0)
    def _():
        acc_ref[...] = jnp.zeros_like(acc_ref)

    tb, nj = pred_ref.shape[0], pred_ref.shape[1]
    n_slabs = thw // 128
    # Valid lanes in the LAST chunk (static).  Only slabs that can overhang it
    # need a dynamic tail mask; all other slabs are always fully valid.
    last_valid = hw - (pl.cdiv(hw, thw) - 1) * thw
    ragged = last_valid != thw

    if ragged:
        valid = hw - k * thw  # lanes valid in THIS chunk (scalar)
        lane = jax.lax.broadcasted_iota(jnp.int32, (tb, nj, 128), 2)

    # Hot path: per 128-lane slab -> load, subtract, (mask), square, add.
    # Pure VPU work; the cross-lane reduce is deferred to the epilogue.
    part = None
    for c in range(n_slabs):
        lo, hi = c * 128, (c + 1) * 128
        d = (pred_ref[:, :, lo:hi].astype(jnp.float32)
             - tgt_ref[:, :, lo:hi].astype(jnp.float32))
        if ragged and hi > last_valid:
            d = jnp.where(lane < (valid - lo), d, jnp.float32(0.0))
        sq = d * d
        part = sq if part is None else part + sq
    acc_ref[...] += part

    @pl.when(k == pl.num_programs(1) - 1)
    def _():
        # One cross-lane reduce + 0.5 * mean over the TRUE hw.
        per_joint = jnp.sum(acc_ref[...], axis=-1) * jnp.float32(0.5 / hw)  # (tb, J)
        if use_target_weight:
            w = w_ref[...].reshape(tb, nj).astype(jnp.float32)
            per_joint = per_joint * (w * w)  # (w*p - w*g)^2 == w^2 (p-g)^2

        iota = jax.lax.broadcasted_iota(jnp.int32, (tb, nj), 1)
        # OHKM: per-sample sum of top-k joint losses / k.  Peel the row max
        # `topk` times, masking exactly one occurrence per step (tie-safe,
        # matches lax.top_k duplicate semantics).
        work = per_joint
        acc = jnp.zeros((tb, 1), jnp.float32)
        for _ in range(topk):
            row_max = jnp.max(work, axis=1, keepdims=True)  # (tb, 1)
            acc = acc + row_max
            cand = jnp.where(work == row_max, iota, jnp.int32(nj))
            min_idx = jnp.min(cand, axis=1, keepdims=True)
            work = jnp.where(iota == min_idx, -jnp.inf, work)

        out_ref[...] = (acc * jnp.float32(1.0 / topk)).reshape(tb, 1, 1)


def _device_budgets():
    """(block_budget_bytes, hw_tile_cap, vmem_limit_cap, prefer_batch_split)."""
    vmem_cap = None
    try:
        vmem_cap = int(pltpu.get_tpu_info().vmem_capacity_bytes)
    except Exception:
        vmem_cap = None
    if vmem_cap is None or vmem_cap <= 64 * 2 ** 20:
        # v7x-like (64 MiB VMEM/TC, 2 TCs) or unknown: conservative blocks,
        # ~48 MiB scoped limit, and prefer nb >= 2 so both cores get work.
        return 5 * 2 ** 20, 2048, 48 * 2 ** 20, True
    # v5e / v6e: 128 MiB VMEM, single TensorCore -> big streamed blocks.
    return 12 * 2 ** 20, 4096, 96 * 2 ** 20, False


def _choose_hw_tile(hw, j, itemsize, block_budget, thw_cap):
    """Largest multiple of 128 covering hw, capped by budget and generation cap."""
    hw_pad = pl.cdiv(hw, 128) * 128
    max_by_budget = max(128, (block_budget // (j * itemsize)) // 128 * 128)
    return int(max(128, min(hw_pad, thw_cap, max_by_budget)))


def _choose_batch_tile(b, j, thw, itemsize, block_budget, prefer_split):
    """Largest divisor of B whose block fits the budget (nb>=2 when preferred)."""
    divs = [d for d in range(1, b + 1) if b % d == 0]
    fit = [d for d in divs if d * j * thw * itemsize <= block_budget] or [1]
    if prefer_split and b >= 2:
        split = [d for d in fit if b // d >= 2]
        if split:
            return max(split)
    return max(fit)


def joints_ohkm_mse_loss(output, target, target_weight, *,
                         use_target_weight=True, topk=8, hw_tile=None):
    """output/target: (B, J, H, W); target_weight: (B, J, 1). Returns scalar."""
    B, J = output.shape[0], output.shape[1]
    hw = 1
    for d in output.shape[2:]:
        hw *= d
    assert topk <= J, "topk must be <= num_joints"

    # Keep the upstream dtype for the streamed heatmaps; accumulate in f32.
    pred = output.reshape(B, J, hw)
    gt = target.reshape(B, J, hw)
    itemsize = jnp.dtype(pred.dtype).itemsize

    block_budget, thw_cap, vmem_cap, prefer_split = _device_budgets()

    thw = _choose_hw_tile(hw, J, itemsize, block_budget, thw_cap)
    if hw_tile is not None:  # test/benchmark override
        thw = max(128, (int(hw_tile) // 128) * 128)
    nhw = pl.cdiv(hw, thw)

    tb = _choose_batch_tile(B, J, thw, itemsize, block_budget, prefer_split)
    nb = B // tb

    inputs = [pred, gt]
    in_specs = [
        pl.BlockSpec((tb, J, thw), lambda b, k: (b, 0, k)),
        pl.BlockSpec((tb, J, thw), lambda b, k: (b, 0, k)),
    ]
    w_block_bytes = 0
    if use_target_weight:
        # (B, J, 1) -> (B, 1, J): batch is an outer dim, so tb is unconstrained
        # by the (8, 128) rule; J sits on the lane axis.
        w = target_weight.reshape(B, 1, J).astype(jnp.float32)
        inputs.append(w)
        in_specs.append(pl.BlockSpec((tb, 1, J), lambda b, k: (b, 0, 0)))
        w_block_bytes = tb * J * 4

    in_block = tb * J * thw * itemsize
    slab_temp = tb * J * 128 * 4
    scratch_bytes = tb * J * 128 * 4
    vmem_need = (4 * in_block            # 2 streamed inputs x double buffer
                 + 2 * w_block_bytes + 2 * tb * 4
                 + scratch_bytes + 4 * slab_temp)
    vmem_limit = int(min(max(2 * vmem_need, 16 * 2 ** 20), vmem_cap))

    kernel = functools.partial(
        _ohkm_mse_kernel, topk=topk, hw=hw, thw=thw,
        use_target_weight=use_target_weight)

    cost = pl.CostEstimate(
        flops=int(3 * B * J * hw + 16 * B * J * topk),
        transcendentals=0,
        bytes_accessed=int(2 * B * J * hw * itemsize
                           + (B * J * 4 if use_target_weight else 0) + B * 4),
    )

    per_sample = pl.pallas_call(
        kernel,
        out_shape=jax.ShapeDtypeStruct((B, 1, 1), jnp.float32),
        grid_spec=pltpu.PrefetchScalarGridSpec(
            num_scalar_prefetch=0,
            grid=(nb, nhw),
            in_specs=in_specs,
            out_specs=pl.BlockSpec((tb, 1, 1), lambda b, k: (b, 0, 0)),
            scratch_shapes=[pltpu.VMEM((tb, J, 128), jnp.float32)],
        ),
        compiler_params=pltpu.CompilerParams(
            dimension_semantics=("parallel", "arbitrary"),
            vmem_limit_bytes=vmem_limit,
        ),
        cost_estimate=cost,
    )(*inputs)

    # Trivial final mean over batch (per-sample OHKM already computed in-kernel).
    return jnp.mean(per_sample)


def _reference_loss(output, target, target_weight, *,
                    use_target_weight=True, topk=8):
    """Pure-JAX reference mirroring the PyTorch module."""
    B, J = output.shape[0], output.shape[1]
    pred = output.reshape(B, J, -1).astype(jnp.float32)
    gt = target.reshape(B, J, -1).astype(jnp.float32)
    if use_target_weight:
        wt = target_weight.reshape(B, J, 1).astype(jnp.float32)
        pred = pred * wt
        gt = gt * wt
    per_joint = 0.5 * jnp.mean((pred - gt) ** 2, axis=-1)          # (B, J)
    topk_vals = jax.lax.top_k(per_joint, topk)[0]                  # (B, topk)
    return jnp.mean(jnp.sum(topk_vals, axis=1) / topk)


if __name__ == "__main__":
    TOPK = 8
    base_key = jax.random.PRNGKey(0)

    # Case 1: B=2, J=16, 16x16 heatmaps (HW multiple of 128, single chunk).
    # Case 2: B=4, J=16, 17x17 heatmaps (HW=289, ragged lane tail) with a
    #         forced small hw tile so the multi-chunk + tail-mask path runs.
    cases = [
        dict(B=2, J=16, H=16, W=16, hw_tile=None),
        dict(B=4, J=16, H=17, W=17, hw_tile=128),
    ]
    for c in cases:
        k1, k2, k3 = jax.random.split(jax.random.fold_in(base_key, c["H"]), 3)
        output = jax.random.normal(k1, (c["B"], c["J"], c["H"], c["W"]),
                                   dtype=jnp.float32)
        target = jax.random.normal(k2, (c["B"], c["J"], c["H"], c["W"]),
                                   dtype=jnp.float32)
        target_weight = jax.random.uniform(k3, (c["B"], c["J"], 1),
                                           dtype=jnp.float32)
        for use_w in (True, False):
            loss = joints_ohkm_mse_loss(
                output, target, target_weight,
                use_target_weight=use_w, topk=TOPK, hw_tile=c["hw_tile"])
            loss = jax.block_until_ready(loss)
            ref = _reference_loss(
                output, target, target_weight,
                use_target_weight=use_w, topk=TOPK)
            assert jnp.allclose(loss, ref, rtol=1e-5, atol=1e-6), \
                (c, use_w, loss, ref)

    print("KERNEL_OK")
</pallas_src>

<mosaic_0001>
module attributes {stable_mosaic.version = 11 : i64} {
  func.func @_ohkm_mse_kernel(%arg0: i32, %arg1: i32, %arg2: memref<1x16x256xf32, #tpu.memory_space<vmem>>, %arg3: memref<1x16x256xf32, #tpu.memory_space<vmem>>, %arg4: memref<1x1x16xf32, #tpu.memory_space<vmem>>, %arg5: memref<1x1x1xf32, #tpu.memory_space<vmem>>, %arg6: memref<1x16x128xf32, #tpu.memory_space<vmem>>) attributes {dimension_semantics = [#tpu.dimension_semantics<parallel>, #tpu.dimension_semantics<arbitrary>], iteration_bounds = array<i64: 2, 1>, scalar_prefetch = 0 : i64, scratch_operands = 1 : i64, tpu.core_type = #tpu.core_type<tc>, window_params = [{transform_indices = @transform_0, window_bounds = array<i64: 1, 16, 256>}, {transform_indices = @transform_1, window_bounds = array<i64: 1, 16, 256>}, {transform_indices = @transform_2, window_bounds = array<i64: 1, 1, 16>}, {transform_indices = @transform_3, window_bounds = array<i64: 1, 1, 1>}]} {
    %c0_i32 = arith.constant 0 : i32
    %0 = arith.cmpi eq, %arg1, %c0_i32 : i32
    %1 = arith.extui %0 : i1 to i32
    %c0_i32_0 = arith.constant 0 : i32
    %2 = arith.cmpi ne, %1, %c0_i32_0 : i32
    scf.if %2 {
      %cst = arith.constant 0.000000e+00 : f32
      %18 = vector.broadcast %cst : f32 to vector<1x16x128xf32>
      %c0_19 = arith.constant 0 : index
      %c0_20 = arith.constant 0 : index
      %c0_21 = arith.constant 0 : index
      %19 = vector.load %arg6[%c0_19, %c0_20, %c0_21] : memref<1x16x128xf32, #tpu.memory_space<vmem>>, vector<1x16x128xf32>
      tpu.vector_store %arg6[%c0_19, %c0_20, %c0_21], %18 {strides = array<i32>} : memref<1x16x128xf32, #tpu.memory_space<vmem>>, vector<1x16x128xf32>,
    } else {
    }
    %c0 = arith.constant 0 : index
    %c0_1 = arith.constant 0 : index
    %c0_2 = arith.constant 0 : index
    %3 = vector.load %arg2[%c0, %c0_1, %c0_2] : memref<1x16x256xf32, #tpu.memory_space<vmem>>, vector<1x16x128xf32>
    %c0_3 = arith.constant 0 : index
    %c0_4 = arith.constant 0 : index
    %c0_5 = arith.constant 0 : index
    %4 = vector.load %arg3[%c0_3, %c0_4, %c0_5] : memref<1x16x256xf32, #tpu.memory_space<vmem>>, vector<1x16x128xf32>
    %5 = arith.subf %3, %4 : vector<1x16x128xf32>
    %6 = arith.mulf %5, %5 : vector<1x16x128xf32>
    %c0_6 = arith.constant 0 : index
    %c0_7 = arith.constant 0 : index
    %c128 = arith.constant 128 : index
    %7 = vector.load %arg2[%c0_6, %c0_7, %c128] : memref<1x16x256xf32, #tpu.memory_space<vmem>>, vector<1x16x128xf32>
    %c0_8 = arith.constant 0 : index
    %c0_9 = arith.constant 0 : index
    %c128_10 = arith.constant 128 : index
    %8 = vector.load %arg3[%c0_8, %c0_9, %c128_10] : memref<1x16x256xf32, #tpu.memory_space<vmem>>, vector<1x16x128xf32>
    %9 = arith.subf %7, %8 : vector<1x16x128xf32>
    %10 = arith.mulf %9, %9 : vector<1x16x128xf32>
    %11 = arith.addf %6, %10 : vector<1x16x128xf32>
    %c0_11 = arith.constant 0 : index
    %c0_12 = arith.constant 0 : index
    %c0_13 = arith.constant 0 : index
    %12 = vector.load %arg6[%c0_11, %c0_12, %c0_13] : memref<1x16x128xf32, #tpu.memory_space<vmem>>, vector<1x16x128xf32>
    %13 = arith.addf %12, %11 : vector<1x16x128xf32>
    %c0_14 = arith.constant 0 : index
    %c0_15 = arith.constant 0 : index
    %c0_16 = arith.constant 0 : index
    %14 = vector.load %arg6[%c0_14, %c0_15, %c0_16] : memref<1x16x128xf32, #tpu.memory_space<vmem>>, vector<1x16x128xf32>
    tpu.vector_store %arg6[%c0_14, %c0_15, %c0_16], %13 {strides = array<i32>} : memref<1x16x128xf32, #tpu.memory_space<vmem>>, vector<1x16x128xf32>,
    %c0_i32_17 = arith.constant 0 : i32
    %15 = arith.cmpi eq, %arg1, %c0_i32_17 : i32
    %16 = arith.extui %15 : i1 to i32
    %c0_i32_18 = arith.constant 0 : i32
    %17 = arith.cmpi ne, %16, %c0_i32_18 : i32
    scf.if %17 {
      %c0_19 = arith.constant 0 : index
      %c0_20 = arith.constant 0 : index
      %c0_21 = arith.constant 0 : index
      %18 = vector.load %arg6[%c0_19, %c0_20, %c0_21] : memref<1x16x128xf32, #tpu.memory_space<vmem>>, vector<1x16x128xf32>
      %cst = arith.constant dense<0.000000e+00> : vector<1x16xf32>
      %19 = vector.multi_reduction <add>, %18, %cst [2] : vector<1x16x128xf32> to vector<1x16xf32>
      %cst_22 = arith.constant 0.001953125 : f32
      %20 = vector.broadcast %cst_22 : f32 to vector<1x16xf32>
      %21 = arith.mulf %19, %20 : vector<1x16xf32>
      %c0_23 = arith.constant 0 : index
      %c0_24 = arith.constant 0 : index
      %c0_25 = arith.constant 0 : index
      %22 = vector.load %arg4[%c0_23, %c0_24, %c0_25] : memref<1x1x16xf32, #tpu.memory_space<vmem>>, vector<1x1x16xf32>
      %23 = vector.shape_cast %22 : vector<1x1x16xf32> to vector<1x16xf32>
      %24 = arith.mulf %23, %23 : vector<1x16xf32>
      %25 = arith.mulf %21, %24 : vector<1x16xf32>
      %26 = tpu.iota {dimensions = array<i32: 1>} : vector<1x16xi32>
      %cst_26 = arith.constant 0.000000e+00 : f32
      %27 = vector.broadcast %cst_26 : f32 to vector<1x1xf32>
      %cst_27 = arith.constant dense<0xFF800000> : vector<1xf32>
      %28 = vector.multi_reduction <maximumf>, %25, %cst_27 [1] : vector<1x16xf32> to vector<1xf32>
      %29 = vector.shape_cast %28 : vector<1xf32> to vector<1x1xf32>
      %30 = arith.addf %27, %29 : vector<1x1xf32>
      %31 = vector.broadcast %29 : vector<1x1xf32> to vector<1x16xf32>
      %32 = arith.cmpf oeq, %25, %31 : vector<1x16xf32>
      %c16_i32 = arith.constant 16 : i32
      %33 = vector.broadcast %c16_i32 : i32 to vector<1x16xi32>
      %34 = arith.select %32, %26, %33 : vector<1x16xi1>, vector<1x16xi32>
      %cst_28 = arith.constant dense<2147483647> : vector<1xi32>
      %35 = vector.multi_reduction <minsi>, %34, %cst_28 [1] : vector<1x16xi32> to vector<1xi32>
      %36 = vector.shape_cast %35 : vector<1xi32> to vector<1x1xi32>
      %37 = vector.broadcast %36 : vector<1x1xi32> to vector<1x16xi32>
      %38 = arith.cmpi eq, %26, %37 : vector<1x16xi32>
      %cst_29 = arith.constant 0xFF800000 : f32
      %39 = vector.broadcast %cst_29 : f32 to vector<1x16xf32>
      %40 = arith.select %38, %39, %25 : vector<1x16xi1>, vector<1x16xf32>
      %cst_30 = arith.constant dense<0xFF800000> : vector<1xf32>
      %41 = vector.multi_reduction <maximumf>, %40, %cst_30 [1] : vector<1x16xf32> to vector<1xf32>
      %42 = vector.shape_cast %41 : vector<1xf32> to vector<1x1xf32>
      %43 = arith.addf %30, %42 : vector<1x1xf32>
      %44 = vector.broadcast %42 : vector<1x1xf32> to vector<1x16xf32>
      %45 = arith.cmpf oeq, %40, %44 : vector<1x16xf32>
      %c16_i32_31 = arith.constant 16 : i32
      %46 = vector.broadcast %c16_i32_31 : i32 to vector<1x16xi32>
      %47 = arith.select %45, %26, %46 : vector<1x16xi1>, vector<1x16xi32>
      %cst_32 = arith.constant dense<2147483647> : vector<1xi32>
      %48 = vector.multi_reduction <minsi>, %47, %cst_32 [1] : vector<1x16xi32> to vector<1xi32>
      %49 = vector.shape_cast %48 : vector<1xi32> to vector<1x1xi32>
      %50 = vector.broadcast %49 : vector<1x1xi32> to vector<1x16xi32>
      %51 = arith.cmpi eq, %26, %50 : vector<1x16xi32>
      %cst_33 = arith.constant 0xFF800000 : f32
      %52 = vector.broadcast %cst_33 : f32 to vector<1x16xf32>
      %53 = arith.select %51, %52, %40 : vector<1x16xi1>, vector<1x16xf32>
      %cst_34 = arith.constant dense<0xFF800000> : vector<1xf32>
      %54 = vector.multi_reduction <maximumf>, %53, %cst_34 [1] : vector<1x16xf32> to vector<1xf32>
      %55 = vector.shape_cast %54 : vector<1xf32> to vector<1x1xf32>
      %56 = arith.addf %43, %55 : vector<1x1xf32>
      %57 = vector.broadcast %55 : vector<1x1xf32> to vector<1x16xf32>
      %58 = arith.cmpf oeq, %53, %57 : vector<1x16xf32>
      %c16_i32_35 = arith.constant 16 : i32
      %59 = vector.broadcast %c16_i32_35 : i32 to vector<1x16xi32>
      %60 = arith.select %58, %26, %59 : vector<1x16xi1>, vector<1x16xi32>
      %cst_36 = arith.constant dense<2147483647> : vector<1xi32>
      %61 = vector.multi_reduction <minsi>, %60, %cst_36 [1] : vector<1x16xi32> to vector<1xi32>
      %62 = vector.shape_cast %61 : vector<1xi32> to vector<1x1xi32>
      %63 = vector.broadcast %62 : vector<1x1xi32> to vector<1x16xi32>
      %64 = arith.cmpi eq, %26, %63 : vector<1x16xi32>
      %cst_37 = arith.constant 0xFF800000 : f32
      %65 = vector.broadcast %cst_37 : f32 to vector<1x16xf32>
      %66 = arith.select %64, %65, %53 : vector<1x16xi1>, vector<1x16xf32>
      %cst_38 = arith.constant dense<0xFF800000> : vector<1xf32>
      %67 = vector.multi_reduction <maximumf>, %66, %cst_38 [1] : vector<1x16xf32> to vector<1xf32>
      %68 = vector.shape_cast %67 : vector<1xf32> to vector<1x1xf32>
      %69 = arith.addf %56, %68 : vector<1x1xf32>
      %70 = vector.broadcast %68 : vector<1x1xf32> to vector<1x16xf32>
      %71 = arith.cmpf oeq, %66, %70 : vector<1x16xf32>
      %c16_i32_39 = arith.constant 16 : i32
      %72 = vector.broadcast %c16_i32_39 : i32 to vector<1x16xi32>
      %73 = arith.select %71, %26, %72 : vector<1x16xi1>, vector<1x16xi32>
      %cst_40 = arith.constant dense<2147483647> : vector<1xi32>
      %74 = vector.multi_reduction <minsi>, %73, %cst_40 [1] : vector<1x16xi32> to vector<1xi32>
      %75 = vector.shape_cast %74 : vector<1xi32> to vector<1x1xi32>
      %76 = vector.broadcast %75 : vector<1x1xi32> to vector<1x16xi32>
      %77 = arith.cmpi eq, %26, %76 : vector<1x16xi32>
      %cst_41 = arith.constant 0xFF800000 : f32
      %78 = vector.broadcast %cst_41 : f32 to vector<1x16xf32>
      %79 = arith.select %77, %78, %66 : vector<1x16xi1>, vector<1x16xf32>
      %cst_42 = arith.constant dense<0xFF800000> : vector<1xf32>
      %80 = vector.multi_reduction <maximumf>, %79, %cst_42 [1] : vector<1x16xf32> to vector<1xf32>
      %81 = vector.shape_cast %80 : vector<1xf32> to vector<1x1xf32>
      %82 = arith.addf %69, %81 : vector<1x1xf32>
      %83 = vector.broadcast %81 : vector<1x1xf32> to vector<1x16xf32>
      %84 = arith.cmpf oeq, %79, %83 : vector<1x16xf32>
      %c16_i32_43 = arith.constant 16 : i32
      %85 = vector.broadcast %c16_i32_43 : i32 to vector<1x16xi32>
      %86 = arith.select %84, %26, %85 : vector<1x16xi1>, vector<1x16xi32>
      %cst_44 = arith.constant dense<2147483647> : vector<1xi32>
      %87 = vector.multi_reduction <minsi>, %86, %cst_44 [1] : vector<1x16xi32> to vector<1xi32>
      %88 = vector.shape_cast %87 : vector<1xi32> to vector<1x1xi32>
      %89 = vector.broadcast %88 : vector<1x1xi32> to vector<1x16xi32>
      %90 = arith.cmpi eq, %26, %89 : vector<1x16xi32>
      %cst_45 = arith.constant 0xFF800000 : f32
      %91 = vector.broadcast %cst_45 : f32 to vector<1x16xf32>
      %92 = arith.select %90, %91, %79 : vector<1x16xi1>, vector<1x16xf32>
      %cst_46 = arith.constant dense<0xFF800000> : vector<1xf32>
      %93 = vector.multi_reduction <maximumf>, %92, %cst_46 [1] : vector<1x16xf32> to vector<1xf32>
      %94 = vector.shape_cast %93 : vector<1xf32> to vector<1x1xf32>
      %95 = arith.addf %82, %94 : vector<1x1xf32>
      %96 = vector.broadcast %94 : vector<1x1xf32> to vector<1x16xf32>
      %97 = arith.cmpf oeq, %92, %96 : vector<1x16xf32>
      %c16_i32_47 = arith.constant 16 : i32
      %98 = vector.broadcast %c16_i32_47 : i32 to vector<1x16xi32>
      %99 = arith.select %97, %26, %98 : vector<1x16xi1>, vector<1x16xi32>
      %cst_48 = arith.constant dense<2147483647> : vector<1xi32>
      %100 = vector.multi_reduction <minsi>, %99, %cst_48 [1] : vector<1x16xi32> to vector<1xi32>
      %101 = vector.shape_cast %100 : vector<1xi32> to vector<1x1xi32>
      %102 = vector.broadcast %101 : vector<1x1xi32> to vector<1x16xi32>
      %103 = arith.cmpi eq, %26, %102 : vector<1x16xi32>
      %cst_49 = arith.constant 0xFF800000 : f32
      %104 = vector.broadcast %cst_49 : f32 to vector<1x16xf32>
      %105 = arith.select %103, %104, %92 : vector<1x16xi1>, vector<1x16xf32>
      %cst_50 = arith.constant dense<0xFF800000> : vector<1xf32>
      %106 = vector.multi_reduction <maximumf>, %105, %cst_50 [1] : vector<1x16xf32> to vector<1xf32>
      %107 = vector.shape_cast %106 : vector<1xf32> to vector<1x1xf32>
      %108 = arith.addf %95, %107 : vector<1x1xf32>
      %109 = vector.broadcast %107 : vector<1x1xf32> to vector<1x16xf32>
      %110 = arith.cmpf oeq, %105, %109 : vector<1x16xf32>
      %c16_i32_51 = arith.constant 16 : i32
      %111 = vector.broadcast %c16_i32_51 : i32 to vector<1x16xi32>
      %112 = arith.select %110, %26, %111 : vector<1x16xi1>, vector<1x16xi32>
      %cst_52 = arith.constant dense<2147483647> : vector<1xi32>
      %113 = vector.multi_reduction <minsi>, %112, %cst_52 [1] : vector<1x16xi32> to vector<1xi32>
      %114 = vector.shape_cast %113 : vector<1xi32> to vector<1x1xi32>
      %115 = vector.broadcast %114 : vector<1x1xi32> to vector<1x16xi32>
      %116 = arith.cmpi eq, %26, %115 : vector<1x16xi32>
      %cst_53 = arith.constant 0xFF800000 : f32
      %117 = vector.broadcast %cst_53 : f32 to vector<1x16xf32>
      %118 = arith.select %116, %117, %105 : vector<1x16xi1>, vector<1x16xf32>
      %cst_54 = arith.constant dense<0xFF800000> : vector<1xf32>
      %119 = vector.multi_reduction <maximumf>, %118, %cst_54 [1] : vector<1x16xf32> to vector<1xf32>
      %120 = vector.shape_cast %119 : vector<1xf32> to vector<1x1xf32>
      %121 = arith.addf %108, %120 : vector<1x1xf32>
      %cst_55 = arith.constant 1.250000e-01 : f32
      %122 = vector.broadcast %cst_55 : f32 to vector<1x1xf32>
      %123 = arith.mulf %121, %122 : vector<1x1xf32>
      %124 = vector.shape_cast %123 : vector<1x1xf32> to vector<1x1x1xf32>
      %c0_56 = arith.constant 0 : index
      %c0_57 = arith.constant 0 : index
      %c0_58 = arith.constant 0 : index
      %125 = vector.load %arg5[%c0_56, %c0_57, %c0_58] : memref<1x1x1xf32, #tpu.memory_space<vmem>>, vector<1x1x1xf32>
      tpu.vector_store %arg5[%c0_56, %c0_57, %c0_58], %124 {strides = array<i32>} : memref<1x1x1xf32, #tpu.memory_space<vmem>>, vector<1x1x1xf32>,
    } else {
    }
    return
  }
  func.func @transform_0(%arg0: i32, %arg1: i32) -> (i32, i32, i32) {
    %c0_i32 = arith.constant 0 : i32
    %c0_i32_0 = arith.constant 0 : i32
    return %arg0, %c0_i32, %arg1 : i32, i32, i32
  }
  func.func @transform_1(%arg0: i32, %arg1: i32) -> (i32, i32, i32) {
    %c0_i32 = arith.constant 0 : i32
    %c0_i32_0 = arith.constant 0 : i32
    return %arg0, %c0_i32, %arg1 : i32, i32, i32
  }
  func.func @transform_2(%arg0: i32, %arg1: i32) -> (i32, i32, i32) {
    %c0_i32 = arith.constant 0 : i32
    %c0_i32_0 = arith.constant 0 : i32
    %c0_i32_1 = arith.constant 0 : i32
    return %arg0, %c0_i32, %c0_i32_0 : i32, i32, i32
  }
  func.func @transform_3(%arg0: i32, %arg1: i32) -> (i32, i32, i32) {
    %c0_i32 = arith.constant 0 : i32
    %c0_i32_0 = arith.constant 0 : i32
    %c0_i32_1 = arith.constant 0 : i32
    return %arg0, %c0_i32, %c0_i32_0 : i32, i32, i32
  }
}

</mosaic_0001>

<llo_original>
// kernel: tpu_custom_call.1
$region0: #{tpu_custom_call.1}
  #allocation0 [shape = 'u32[]', space=smem, size = 0x4, offset = 0x4, fixed_abs, tag = 'smem constant byte address 0x4 - core index']
  #allocation1 [shape = 'u32[72,128]{1,0:T(1,128)}', space=vmem, size = 0x9000, scoped, tag = 'internal scratch']
  #allocation2 [shape = 'f32[1,16,128]{2,1,0:T(8,128)}', space=vmem, size = 0x2000, scoped, tag = 'scratch operand']
  %s0 = inlined_call_operand.hbm [shape: f32[2,16,256], index: 0, kind: input, shape index: {}]
  %s1 = inlined_call_operand.hbm [shape: f32[2,16,256], index: 1, kind: input, shape index: {}]
  %s2 = inlined_call_operand.hbm [shape: f32[2,1,16], index: 2, kind: input, shape index: {}]
  %s3 = inlined_call_operand.vmem [shape: f32[2,1,1], index: 3, kind: output, shape index: {}]
  %s4 = sld [smem:[#allocation0]]
  $region65: #{tpu_custom_call.1} parent=0
    _
  %s6 = ssub.s32 1, %s4
  %s7 = scalar_select 0, %s6, %s4
  $region1: #{tpu_custom_call.1} parent=0
    #allocation3 [shape = 'u8[32768]{0}', space=vmem, size = 0x8000, scoped, tag = 'input window, operand 0']
    #allocation4 [shape = 's32[2]{0}', space=sflag, size = 0x8, scoped, tag = 'scoped memory for tpu_custom_call.1']
    #allocation5 [shape = 'u8[32768]{0}', space=vmem, size = 0x8000, scoped, tag = 'input window, operand 1']
    #allocation6 [shape = 's32[2]{0}', space=sflag, size = 0x8, scoped, tag = 'scoped memory for tpu_custom_call.1']
    #allocation7 [shape = 'u8[1024]{0}', space=vmem, size = 0x400, scoped, tag = 'input window, operand 2']
    %8 = vsyncpa [#allocation4], 0
    %s9 = scalar_lea.sflag [#allocation4], 1
    %10 = vsyncpa %s9, 0
    %11 = vsyncpa [#allocation6], 0
    %s12 = scalar_lea.sflag [#allocation6], 1
    %13 = vsyncpa %s12, 0
    loop: start=0, step=1, limit=4
    $region2: #{tpu_custom_call.1} parent=1 // loop_pre_header
      _
    $region3: #{tpu_custom_call.1} parent=1 // loop_header
      %s15 = sphi 0, %s19
      %p16 = scmp.ge.s32.totalorder %s15, 4
      %s22 = sphi 0, %s34
      %s23 = sphi 0, %s30
      %s24 = sphi 0, %s22
      %s25 = sphi 0, %s23
      %s26 = sphi 0, %s24
      %s27 = sphi 0, %s25
      %s39 = sphi 0, %s41
      %s42 = sphi 0, %s39
      %s43 = sphi 0, %s42
      %s59 = sphi 0, %s43
      %s67 = sphi 0, %s69
      %s70 = sphi 0, %s67
      %s71 = sphi 0, %s70
      %s87 = sphi 0, %s71
      %s93 = sphi 0, %s95
      %s96 = sphi 0, %s93
      %s97 = sphi 0, %s96
      %s113 = sphi 0, %s97
      %s119 = sphi 0, %s121
      %s122 = sphi 0, %s119
      %s123 = sphi 0, %s122
      %s139 = sphi 0, %s123
    $region4: #{tpu_custom_call.1} parent=1 // loop_header_branch
      %18 = sbr.rel (%p16) target = $region8
    $region5: #{tpu_custom_call.1} parent=1 // loop_body
      %s20 = ssub.s32 %s15, 1
      %s21 = ssub.s32 %s15, 2
      %s28 = sadd.s32 1, %s23
      %p29 = scmp.ge.s32.totalorder %s28, 1
      %s30 = scalar_select %p29, 0, %s28
      %s31 = sadd.s32 1, %s22
      %s32 = scalar_select %p29, %s31, %s22
      %p33 = scmp.ge.s32.totalorder %s32, 2
      %s34 = scalar_select %p33, 0, %s32
      %s35 = ssub.s32 %s22, %s34
      %s36 = ssub.s32 %s23, %s30
      %s37 = sor.u32 %s35, %s36
      %p38 = scmp.eq.s32.totalorder %s37, 0
      %s40 = sadd.s32 %s39, 1
      %s41 = scalar_select %p38, %s39, %s40
      %p44 = pneg %p38
      %p45 = scmp.eq.s32.totalorder %s15, 1
      %p46 = por %p44, %p45
      %p47 = scmp.ne.s32.totalorder %s39, %s42
      %p48 = scmp.eq.s32.totalorder %s15, 0
      %p49 = por %p47, %p48
      %p50 = scmp.ne.s32.totalorder %s39, %s42
      %p51 = scmp.eq.s32.totalorder %s20, 1
      %p52 = por %p50, %p51
      %p53 = scmp.ne.s32.totalorder %s42, %s43
      %p54 = scmp.eq.s32.totalorder %s20, 0
      %p55 = por %p53, %p54
      %p56 = scmp.ne.s32.totalorder %s42, %s43
      %p57 = scmp.eq.s32.totalorder %s21, 1
      %p58 = por %p56, %p57
      %p60 = scmp.ne.s32.totalorder %s43, %s59
      %p61 = scmp.eq.s32.totalorder %s21, 0
      %p62 = por %p60, %p61
      %s63 = ssub.s32 %s22, %s34
      %s64 = ssub.s32 %s23, %s30
      %s65 = sor.u32 %s63, %s64
      %p66 = scmp.eq.s32.totalorder %s65, 0
      %s68 = sadd.s32 %s67, 1
      %s69 = scalar_select %p66, %s67, %s68
      %p72 = pneg %p66
      %p73 = scmp.eq.s32.totalorder %s15, 1
      %p74 = por %p72, %p73
      %p75 = scmp.ne.s32.totalorder %s67, %s70
      %p76 = scmp.eq.s32.totalorder %s15, 0
      %p77 = por %p75, %p76
      %p78 = scmp.ne.s32.totalorder %s67, %s70
      %p79 = scmp.eq.s32.totalorder %s20, 1
      %p80 = por %p78, %p79
      %p81 = scmp.ne.s32.totalorder %s70, %s71
      %p82 = scmp.eq.s32.totalorder %s20, 0
      %p83 = por %p81, %p82
      %p84 = scmp.ne.s32.totalorder %s70, %s71
      %p85 = scmp.eq.s32.totalorder %s21, 1
      %p86 = por %p84, %p85
      %p88 = scmp.ne.s32.totalorder %s71, %s87
      %p89 = scmp.eq.s32.totalorder %s21, 0
      %p90 = por %p88, %p89
      %s91 = ssub.s32 %s22, %s34
      %p92 = scmp.eq.s32.totalorder %s91, 0
      %s94 = sadd.s32 %s93, 1
      %s95 = scalar_select %p92, %s93, %s94
      %p98 = pneg %p92
      %p99 = scmp.eq.s32.totalorder %s15, 1
      %p100 = por %p98, %p99
      %p101 = scmp.ne.s32.totalorder %s93, %s96
      %p102 = scmp.eq.s32.totalorder %s15, 0
      %p103 = por %p101, %p102
      %p104 = scmp.ne.s32.totalorder %s93, %s96
      %p105 = scmp.eq.s32.totalorder %s20, 1
      %p106 = por %p104, %p105
      %p107 = scmp.ne.s32.totalorder %s96, %s97
      %p108 = scmp.eq.s32.totalorder %s20, 0
      %p109 = por %p107, %p108
      %p110 = scmp.ne.s32.totalorder %s96, %s97
      %p111 = scmp.eq.s32.totalorder %s21, 1
      %p112 = por %p110, %p111
      %p114 = scmp.ne.s32.totalorder %s97, %s113
      %p115 = scmp.eq.s32.totalorder %s21, 0
      %p116 = por %p114, %p115
      %s117 = ssub.s32 %s22, %s34
      %p118 = scmp.eq.s32.totalorder %s117, 0
      %s120 = sadd.s32 %s119, 1
      %s121 = scalar_select %p118, %s119, %s120
      %p124 = pneg %p118
      %p125 = scmp.eq.s32.totalorder %s15, 1
      %p126 = por %p124, %p125
      %p127 = scmp.ne.s32.totalorder %s119, %s122
      %p128 = scmp.eq.s32.totalorder %s15, 0
      %p129 = por %p127, %p128
      %p130 = scmp.ne.s32.totalorder %s119, %s122
      %p131 = scmp.eq.s32.totalorder %s20, 1
      %p132 = por %p130, %p131
      %p133 = scmp.ne.s32.totalorder %s122, %s123
      %p134 = scmp.eq.s32.totalorder %s20, 0
      %p135 = por %p133, %p134
      %p136 = scmp.ne.s32.totalorder %s122, %s123
      %p137 = scmp.eq.s32.totalorder %s21, 1
      %p138 = por %p136, %p137
      %p140 = scmp.ne.s32.totalorder %s123, %s139
      %p141 = scmp.eq.s32.totalorder %s21, 0
      %p142 = por %p140, %p141
      %p143 = scmp.le.s32.totalorder 1, %s15
      %p144 = scmp.lt.s32.totalorder %s15, 3
      %p145 = pnand %p143, %p144
      %p146 = pneg %p145
      // Predicated region
      $region9: #{tpu_custom_call.1} parent=5 // pred_check
        _
      $region10: #{tpu_custom_call.1} parent=5 // pred_check_branch
        %148 = sbr.rel (%p145) target = $region12
      $region11: #{tpu_custom_call.1} parent=5 // pred_region
        %s149 = ssub.s32 %s15, 1
      $region12: #{tpu_custom_call.1} parent=5 // pred_fallthru
        _
      %p150 = scmp.lt.s32.totalorder %s15, 2
      // Predicated region
      $region13: #{tpu_custom_call.1} parent=5 // pred_check
        %p151 = pneg %p150
      $region14: #{tpu_custom_call.1} parent=5 // pred_check_branch
        %153 = sbr.rel (%p151) target = $region16
      $region15: #{tpu_custom_call.1} parent=5 // pred_region
        // Predicated region
        $region17: #{tpu_custom_call.1} parent=15 // pred_check
          %p154 = pneg %p49
        $region18: #{tpu_custom_call.1} parent=15 // pred_check_branch
          %156 = sbr.rel (%p154) target = $region20
        $region19: #{tpu_custom_call.1} parent=15 // pred_region
          %s157 = sand.u32 %s39, 1
          %s158 = scalar_lea.sflag [#allocation4], %s157
          %s159 = sand.u32 %s39, 1
          %s160 = smul.addr %s159, 32
          %s161 = scalar_lea.vmem [#allocation3], %s160
          %s162 = smul.u32 2, %s23
          %164 = vsyncadd %s158, 0
          %s165 = smul.addr %s22, 4
          %s166 = sadd.s32 %s162, %s165
          %s167 = smul.addr %s166, 8
          %s168 = scalar_lea.hbm %s0, %s167
          %s169 = sshll.u32 %s168, 4
          %s170 = int_to_ptr.hbm [resolvable:$true] %s169
          %s171 = sshll.u32 %s161, 4
          %s172 = int_to_ptr.vmem [resolvable:$true] %s171
          %177 = dma.hbm_to_vmem [thread:$0]  %s170, 512, %s172, %s158, 256, 256, 16
        $region20: #{tpu_custom_call.1} parent=15 // pred_fallthru
          _
        // Predicated region
        $region21: #{tpu_custom_call.1} parent=15 // pred_check
          %p178 = pneg %p77
        $region22: #{tpu_custom_call.1} parent=15 // pred_check_branch
          %180 = sbr.rel (%p178) target = $region24
        $region23: #{tpu_custom_call.1} parent=15 // pred_region
          %s181 = sand.u32 %s15, 1
          %s182 = scalar_lea.sflag [#allocation6], %s181
          %s183 = sand.u32 %s67, 1
          %s184 = smul.addr %s183, 32
          %s185 = scalar_lea.vmem [#allocation5], %s184
          %s186 = smul.u32 2, %s23
          %188 = vsyncadd %s182, 0
          %s189 = smul.addr %s22, 4
          %s190 = sadd.s32 %s186, %s189
          %s191 = smul.addr %s190, 8
          %s192 = scalar_lea.hbm %s1, %s191
          %s193 = sshll.u32 %s192, 4
          %s194 = int_to_ptr.hbm [resolvable:$true] %s193
          %s195 = sshll.u32 %s185, 4
          %s196 = int_to_ptr.vmem [resolvable:$true] %s195
          %201 = dma.hbm_to_vmem [thread:$0]  %s194, 512, %s196, %s182, 256, 256, 16
        $region24: #{tpu_custom_call.1} parent=15 // pred_fallthru
          _
        // Predicated region
        $region25: #{tpu_custom_call.1} parent=15 // pred_check
          %p202 = pneg %p103
        $region26: #{tpu_custom_call.1} parent=15 // pred_check_branch
          %204 = sbr.rel (%p202) target = $region28
        $region27: #{tpu_custom_call.1} parent=15 // pred_region
          %s205 = sand.u32 %s15, 1
          %s206 = scalar_lea.sflag [#allocation6], %s205
          %s207 = sand.u32 %s93, 1
          %s208 = scalar_lea.vmem [#allocation7], %s207
          %210 = vsyncadd %s206, 0
          %s211 = scalar_lea.hbm %s2, %s22
          %s213 = sshll.u32 %s211, 4
          %s214 = int_to_ptr.hbm [resolvable:$true] %s213
          %s215 = sshll.u32 %s208, 4
          %s216 = int_to_ptr.vmem [resolvable:$true] %s215
          %218 = dma.hbm_to_vmem [thread:$0]  %s214, 16, %s216, %s206
        $region28: #{tpu_custom_call.1} parent=15 // pred_fallthru
          _
      $region16: #{tpu_custom_call.1} parent=5 // pred_fallthru
        _
      %p219 = scmp.le.s32.totalorder 1, %s15
      %p220 = scmp.lt.s32.totalorder %s15, 3
      %p221 = pnand %p219, %p220
      %p222 = pneg %p221
      // Predicated region
      $region29: #{tpu_custom_call.1} parent=5 // pred_check
        _
      $region30: #{tpu_custom_call.1} parent=5 // pred_check_branch
        %224 = sbr.rel (%p221) target = $region32
      $region31: #{tpu_custom_call.1} parent=5 // pred_region
        %s225 = ssub.s32 %s15, 1
        %s226 = sand.u32 %s42, 1
        %s227 = scalar_lea.sflag [#allocation4], %s226
        %s228 = sand.u32 %s42, 1
        %s229 = smul.addr %s228, 32
        %s230 = scalar_lea.vmem [#allocation3], %s229
        // Predicated region
        $region33: #{tpu_custom_call.1} parent=31 // pred_check
          %p231 = pneg %p55
        $region34: #{tpu_custom_call.1} parent=31 // pred_check_branch
          %233 = sbr.rel (%p231) target = $region36
        $region35: #{tpu_custom_call.1} parent=31 // pred_region
          %235 = dma.done %s227, 512
        $region36: #{tpu_custom_call.1} parent=31 // pred_fallthru
          _
        %s236 = sand.u32 %s20, 1
        %s237 = scalar_lea.sflag [#allocation6], %s236
        %s238 = sand.u32 %s70, 1
        %s239 = smul.addr %s238, 32
        %s240 = scalar_lea.vmem [#allocation5], %s239
        // Predicated region
        $region37: #{tpu_custom_call.1} parent=31 // pred_check
          %p241 = pneg %p83
        $region38: #{tpu_custom_call.1} parent=31 // pred_check_branch
          %243 = sbr.rel (%p241) target = $region40
        $region39: #{tpu_custom_call.1} parent=31 // pred_region
          %245 = dma.done %s237, 512
        $region40: #{tpu_custom_call.1} parent=31 // pred_fallthru
          _
        %s246 = sand.u32 %s20, 1
        %s247 = scalar_lea.sflag [#allocation6], %s246
        %s248 = sand.u32 %s96, 1
        %s249 = scalar_lea.vmem [#allocation7], %s248
        // Predicated region
        $region41: #{tpu_custom_call.1} parent=31 // pred_check
          %p250 = pneg %p109
        $region42: #{tpu_custom_call.1} parent=31 // pred_check_branch
          %252 = sbr.rel (%p250) target = $region44
        $region43: #{tpu_custom_call.1} parent=31 // pred_region
          %254 = dma.done %s247, 16
        $region44: #{tpu_custom_call.1} parent=31 // pred_fallthru
          _
        %s255 = sand.u32 %s42, 1
        %s256 = scalar_lea.sflag [#allocation4], %s255
        %s257 = sand.u32 %s42, 1
        %s258 = smul.addr %s257, 32
        %s259 = scalar_lea.vmem [#allocation3], %s258
        %p260 = pneg %p55
        %p261 = pneg %p52
        %s262 = sand.u32 %s20, 1
        %s263 = scalar_lea.sflag [#allocation6], %s262
        %s264 = sand.u32 %s70, 1
        %s265 = smul.addr %s264, 32
        %s266 = scalar_lea.vmem [#allocation5], %s265
        %p267 = pneg %p83
        %p268 = pneg %p80
        %s269 = sand.u32 %s20, 1
        %s270 = scalar_lea.sflag [#allocation6], %s269
        %s271 = sand.u32 %s96, 1
        %s272 = scalar_lea.vmem [#allocation7], %s271
        %p273 = pneg %p109
        %p274 = pneg %p106
        %p275 = pneg %p135
        %p276 = pneg %p132
        %p277 = scmp.lt.s32.totalorder %s24, 1
        %s278 = scalar_select %p277, %s24, 1
        %s279 = scalar_lea.vmem %s3, %s278
        %s280 = smul.u32 2, %s25
        %s281 = smul.u32 2, %s25
        %p282 = scmp.lt.s32.totalorder %s24, 1
        %s283 = scalar_select %p282, %s24, 1
        %s284 = scalar_lea.vmem %s3, %s283
        %p285 = scmp.eq.s32.totalorder %s25, 0
        // Predicated region
        $region45: #{tpu_custom_call.1} parent=31 // pred_check
          %p286 = pneg %p285
        $region46: #{tpu_custom_call.1} parent=31 // pred_check_branch
          %288 = sbr.rel (%p286) target = $region48
        $region47: #{tpu_custom_call.1} parent=31 // pred_region
          %289 = vst [vmem:[#allocation2] sm:$0xff] 0.0
          %290 = vst [vmem:[#allocation2 + $0x8] sm:$0xff] 0.0
        $region48: #{tpu_custom_call.1} parent=31 // pred_fallthru
          _
        %v291 = vld [vmem:[%s230] sm:$0xff]
        %v292 = vld [vmem:[%s230 + $0x10] sm:$0xff]
        %v293 = vld [vmem:[%s240] sm:$0xff]
        %v294 = vld [vmem:[%s240 + $0x10] sm:$0xff]
        %v295 = vsub.f32 %v291, %v293
        %v296 = vsub.f32 %v292, %v294
        %v297 = vmul.f32 %v295, %v295
        %v298 = vmul.f32 %v296, %v296
        %v299 = vld [vmem:[%s230 + $0x8] sm:$0xff]
        %v300 = vld [vmem:[%s230 + $0x18] sm:$0xff]
        %v301 = vld [vmem:[%s240 + $0x8] sm:$0xff]
        %v302 = vld [vmem:[%s240 + $0x18] sm:$0xff]
        %v303 = vsub.f32 %v299, %v301
        %v304 = vsub.f32 %v300, %v302
        %v305 = vmul.f32 %v303, %v303
        %v306 = vmul.f32 %v304, %v304
        %v307 = vadd.f32 %v297, %v305
        %v308 = vadd.f32 %v298, %v306
        %v309 = vld [vmem:[#allocation2] sm:$0xff]
        %v310 = vld [vmem:[#allocation2 + $0x8] sm:$0xff]
        %v311 = vadd.f32 %v309, %v307
        %v312 = vadd.f32 %v310, %v308
        %313 = vst [vmem:[#allocation2] sm:$0xff] %v311
        %314 = vst [vmem:[#allocation2 + $0x8] sm:$0xff] %v312
        // Predicated region
        $region49: #{tpu_custom_call.1} parent=31 // pred_check
          %p315 = pneg %p285
        $region50: #{tpu_custom_call.1} parent=31 // pred_check_branch
          %317 = sbr.rel (%p315) target = $region52
        $region51: #{tpu_custom_call.1} parent=31 // pred_region
          %v318 = vld [vmem:[#allocation2] sm:$0xff]
          %v319 = vld [vmem:[#allocation2 + $0x8] sm:$0xff]
          %320 = vadd.xlane.f32.xlu0 %v318
          %v321 = vpop.xlane.xlu0 %320
          %322 = vadd.xlane.f32.xlu0 %v319
          %v323 = vpop.xlane.xlu0 %322
          %v324 = vmul.f32 %v321, 0.001953125
          %v325 = vmul.f32 %v323, 0.001953125
          %v326 = vld [vmem:[%s249] sm:$0x1]
          %v327 = vmul.f32 %v326, %v326
          %v329 = vperm.slane %v327, 0
          %v330 = vlaneseq
          %v331 = vshrl.u32 %v330, 7
          %333 = vset.pattern.permute.xlu0 %v331
          %334 = vperm.xlu0 %333, %v329
          %v335 = vpop.permute.xlu0 %334
          %v336 = vlaneseq
          %v337 = vshrl.u32 %v336, 7
          %v338 = vadd.s32 %v337, 8
          %339 = vset.pattern.permute.xlu0 %v338
          %340 = vperm.xlu0 %339, %v329
          %v341 = vpop.permute.xlu0 %340
          %v344 = vmul.f32 %v324, %v335
          %v345 = vmul.f32 %v325, %v341
          %v346 = vlaneseq
          %v347 = vand.u32 %v346, 127
          %vm348 = vcmask 7168
          %v349 = vsel %vm348, %v344, -inf
          %v350 = vsel %vm348, %v345, -inf
          %v351 = vmax.f32 %v349, %v350
          %v352 = vrot.slane %v351, 4
          %v353 = vmax.f32 %v351, %v352
          %v354 = vrot.slane %v353, 2
          %v355 = vmax.f32 %v353, %v354
          %v356 = vrot.slane %v355, 1
          %v357 = vmax.f32 %v355, %v356
          %v358 = vadd.f32 %v357, 0.0
          %360 = vset.pattern.permute.xlu0 0
          %361 = vperm.xlu0 %360, %v357
          %v362 = vpop.permute.xlu0 %361
          %vm364 = vcmp.eq.f32.partialorder %v344, %v362
          %vm365 = vcmp.eq.f32.partialorder %v345, %v362
          %v366 = vlaneseq
          %v367 = vshrl.u32 %v366, 7
          %369 = vset.pattern.permute.xlu0 %v367
          %370 = vperm.xlu0 %369, %v347
          %v371 = vpop.permute.xlu0 %370
          %v372 = vlaneseq
          %v373 = vshrl.u32 %v372, 7
          %v374 = vadd.s32 %v373, 8
          %375 = vset.pattern.permute.xlu0 %v374
          %376 = vperm.xlu0 %375, %v347
          %v377 = vpop.permute.xlu0 %376
          %v378 = vsel %vm364, %v371, 16
          %v379 = vsel %vm365, %v377, 16
          %v380 = vsel %vm348, %v378, 2147483647
          %v381 = vsel %vm348, %v379, 2147483647
          %vm382 = vcmp.lt.s32.totalorder %v380, %v381
          %v383 = vsel %vm382, %v380, %v381
          %v384 = vrot.slane %v383, 4
          %vm385 = vcmp.lt.s32.totalorder %v383, %v384
          %v386 = vsel %vm385, %v383, %v384
          %v387 = vrot.slane %v386, 2
          %vm388 = vcmp.lt.s32.totalorder %v386, %v387
          %v389 = vsel %vm388, %v386, %v387
          %v390 = vrot.slane %v389, 1
          %vm391 = vcmp.lt.s32.totalorder %v389, %v390
          %v392 = vsel %vm391, %v389, %v390
          %393 = vset.pattern.permute.xlu0 0
          %394 = vperm.xlu0 %393, %v392
          %v395 = vpop.permute.xlu0 %394
          %vm396 = vcmp.eq.s32.totalorder %v347, %v395
          %399 = vset.pattern.permute.xlu0 0
          %400 = vperm.xlu0 %399, %v344
          %v401 = vpop.permute.xlu0 %400
          %402 = vset.pattern.permute.xlu0 0
          %403 = vperm.xlu0 %402, %v345
          %v404 = vpop.permute.xlu0 %403
          %v405 = vperm.slane %v401, %v347
          %v406 = vadd.s32 %v347, 4294967288
          %v407 = vperm.slane %v404, %v406
          %vm408 = vcmask 130112
          %v409 = vsel %vm408, %v407, %v405
          %v411 = vsel %vm396, -inf, %v409
          %vm412 = vcmask 122880
          %v413 = vsel %vm412, %v411, -inf
          %414 = vmax.xlane.f32.xlu0 %v413
          %v415 = vpop.xlane.xlu0 %414
          %v416 = vadd.f32 %v358, %v415
          %vm417 = vcmp.eq.f32.partialorder %v411, %v415
          %v418 = vsel %vm417, %v347, 16
          %v419 = vsel %vm412, %v418, 2147483647
          %v420 = vand.u32 %v419, 65535
          %v421 = vshra.s32 %v419, 16
          %v422 = vcvt.s32.f32 %v420
          %v423 = vcvt.s32.f32 %v421
          %424 = vmin.xlane.f32.xlu0 %v423
          %v425 = vpop.xlane.xlu0 %424
          %vm426 = vcmp.eq.f32.partialorder %v423, %v425
          %v427 = vsel %vm426, %v422, inf
          %428 = vmin.xlane.f32.xlu0 %v427
          %v429 = vpop.xlane.xlu0 %428
          %v430 = vcvt.f32.s32 %v429
          %v431 = vcvt.f32.s32 %v425
          %v432 = vshll.u32 %v431, 16
          %v433 = vadd.s32 %v432, %v430
          %vm434 = vcmp.eq.s32.totalorder %v347, %v433
          %v435 = vsel %vm434, -inf, %v411
          %v436 = vsel %vm412, %v435, -inf
          %437 = vmax.xlane.f32.xlu0 %v436
          %v438 = vpop.xlane.xlu0 %437
          %v439 = vadd.f32 %v416, %v438
          %vm440 = vcmp.eq.f32.partialorder %v435, %v438
          %v441 = vsel %vm440, %v347, 16
          %v442 = vsel %vm412, %v441, 2147483647
          %v443 = vand.u32 %v442, 65535
          %v444 = vshra.s32 %v442, 16
          %v445 = vcvt.s32.f32 %v443
          %v446 = vcvt.s32.f32 %v444
          %447 = vmin.xlane.f32.xlu0 %v446
          %v448 = vpop.xlane.xlu0 %447
          %vm449 = vcmp.eq.f32.partialorder %v446, %v448
          %v450 = vsel %vm449, %v445, inf
          %451 = vmin.xlane.f32.xlu0 %v450
          %v452 = vpop.xlane.xlu0 %451
          %v453 = vcvt.f32.s32 %v452
          %v454 = vcvt.f32.s32 %v448
          %v455 = vshll.u32 %v454, 16
          %v456 = vadd.s32 %v455, %v453
          %vm457 = vcmp.eq.s32.totalorder %v347, %v456
          %v458 = vsel %vm457, -inf, %v435
          %v459 = vsel %vm412, %v458, -inf
          %460 = vmax.xlane.f32.xlu0 %v459
          %v461 = vpop.xlane.xlu0 %460
          %v462 = vadd.f32 %v439, %v461
          %vm463 = vcmp.eq.f32.partialorder %v458, %v461
          %v464 = vsel %vm463, %v347, 16
          %v465 = vsel %vm412, %v464, 2147483647
          %v466 = vand.u32 %v465, 65535
          %v467 = vshra.s32 %v465, 16
          %v468 = vcvt.s32.f32 %v466
          %v469 = vcvt.s32.f32 %v467
          %470 = vmin.xlane.f32.xlu0 %v469
          %v471 = vpop.xlane.xlu0 %470
          %vm472 = vcmp.eq.f32.partialorder %v469, %v471
          %v473 = vsel %vm472, %v468, inf
          %474 = vmin.xlane.f32.xlu0 %v473
          %v475 = vpop.xlane.xlu0 %474
          %v476 = vcvt.f32.s32 %v475
          %v477 = vcvt.f32.s32 %v471
          %v478 = vshll.u32 %v477, 16
          %v479 = vadd.s32 %v478, %v476
          %vm480 = vcmp.eq.s32.totalorder %v347, %v479
          %v481 = vsel %vm480, -inf, %v458
          %v482 = vsel %vm412, %v481, -inf
          %483 = vmax.xlane.f32.xlu0 %v482
          %v484 = vpop.xlane.xlu0 %483
          %v485 = vadd.f32 %v462, %v484
          %vm486 = vcmp.eq.f32.partialorder %v481, %v484
          %v487 = vsel %vm486, %v347, 16
          %v488 = vsel %vm412, %v487, 2147483647
          %v489 = vand.u32 %v488, 65535
          %v490 = vshra.s32 %v488, 16
          %v491 = vcvt.s32.f32 %v489
          %v492 = vcvt.s32.f32 %v490
          %493 = vmin.xlane.f32.xlu0 %v492
          %v494 = vpop.xlane.xlu0 %493
          %vm495 = vcmp.eq.f32.partialorder %v492, %v494
          %v496 = vsel %vm495, %v491, inf
          %497 = vmin.xlane.f32.xlu0 %v496
          %v498 = vpop.xlane.xlu0 %497
          %v499 = vcvt.f32.s32 %v498
          %v500 = vcvt.f32.s32 %v494
          %v501 = vshll.u32 %v500, 16
          %v502 = vadd.s32 %v501, %v499
          %vm503 = vcmp.eq.s32.totalorder %v347, %v502
          %v504 = vsel %vm503, -inf, %v481
          %v505 = vsel %vm412, %v504, -inf
          %506 = vmax.xlane.f32.xlu0 %v505
          %v507 = vpop.xlane.xlu0 %506
          %v508 = vadd.f32 %v485, %v507
          %vm509 = vcmp.eq.f32.partialorder %v504, %v507
          %v510 = vsel %vm509, %v347, 16
          %v511 = vsel %vm412, %v510, 2147483647
          %v512 = vand.u32 %v511, 65535
          %v513 = vshra.s32 %v511, 16
          %v514 = vcvt.s32.f32 %v512
          %v515 = vcvt.s32.f32 %v513
          %516 = vmin.xlane.f32.xlu0 %v515
          %v517 = vpop.xlane.xlu0 %516
          %vm518 = vcmp.eq.f32.partialorder %v515, %v517
          %v519 = vsel %vm518, %v514, inf
          %520 = vmin.xlane.f32.xlu0 %v519
          %v521 = vpop.xlane.xlu0 %520
          %v522 = vcvt.f32.s32 %v521
          %v523 = vcvt.f32.s32 %v517
          %v524 = vshll.u32 %v523, 16
          %v525 = vadd.s32 %v524, %v522
          %vm526 = vcmp.eq.s32.totalorder %v347, %v525
          %v527 = vsel %vm526, -inf, %v504
          %v528 = vsel %vm412, %v527, -inf
          %529 = vmax.xlane.f32.xlu0 %v528
          %v530 = vpop.xlane.xlu0 %529
          %v531 = vadd.f32 %v508, %v530
          %vm532 = vcmp.eq.f32.partialorder %v527, %v530
          %v533 = vsel %vm532, %v347, 16
          %v534 = vsel %vm412, %v533, 2147483647
          %v535 = vand.u32 %v534, 65535
          %v536 = vshra.s32 %v534, 16
          %v537 = vcvt.s32.f32 %v535
          %v538 = vcvt.s32.f32 %v536
          %539 = vmin.xlane.f32.xlu0 %v538
          %v540 = vpop.xlane.xlu0 %539
          %vm541 = vcmp.eq.f32.partialorder %v538, %v540
          %v542 = vsel %vm541, %v537, inf
          %543 = vmin.xlane.f32.xlu0 %v542
          %v544 = vpop.xlane.xlu0 %543
          %v545 = vcvt.f32.s32 %v544
          %v546 = vcvt.f32.s32 %v540
          %v547 = vshll.u32 %v546, 16
          %v548 = vadd.s32 %v547, %v545
          %vm549 = vcmp.eq.s32.totalorder %v347, %v548
          %v550 = vsel %vm549, -inf, %v527
          %v551 = vsel %vm412, %v550, -inf
          %552 = vmax.xlane.f32.xlu0 %v551
          %v553 = vpop.xlane.xlu0 %552
          %v554 = vadd.f32 %v531, %v553
          %v555 = vmul.f32 %v554, 0.125
          %vm556 = vcmask 0
          %557 = vst.msk [vmem:[%s284] sm:$0x1] %vm556, %v555
        $region52: #{tpu_custom_call.1} parent=31 // pred_fallthru
          _
        %p558 = scmp.lt.s32.totalorder %s24, 1
        %s559 = scalar_select %p558, %s24, 1
        %s560 = scalar_lea.vmem %s3, %s559
        // Predicated region
        $region53: #{tpu_custom_call.1} parent=31 // pred_check
          %p561 = pneg %p132
        $region54: #{tpu_custom_call.1} parent=31 // pred_check_branch
          %563 = sbr.rel (%p561) target = $region56
        $region55: #{tpu_custom_call.1} parent=31 // pred_region
          _
        $region56: #{tpu_custom_call.1} parent=31 // pred_fallthru
          _
      $region32: #{tpu_custom_call.1} parent=5 // pred_fallthru
        _
      %p564 = scmp.le.s32.totalorder 2, %s15
      // Predicated region
      $region57: #{tpu_custom_call.1} parent=5 // pred_check
        %p565 = pneg %p564
      $region58: #{tpu_custom_call.1} parent=5 // pred_check_branch
        %567 = sbr.rel (%p565) target = $region60
      $region59: #{tpu_custom_call.1} parent=5 // pred_region
        %s568 = ssub.s32 %s15, 2
        // Predicated region
        $region61: #{tpu_custom_call.1} parent=59 // pred_check
          %p569 = pneg %p138
        $region62: #{tpu_custom_call.1} parent=59 // pred_check_branch
          %571 = sbr.rel (%p569) target = $region64
        $region63: #{tpu_custom_call.1} parent=59 // pred_region
          %p572 = scmp.lt.s32.totalorder %s26, 1
          %s573 = scalar_select %p572, %s26, 1
          %s574 = scalar_lea.vmem %s3, %s573
        $region64: #{tpu_custom_call.1} parent=59 // pred_fallthru
          _
      $region60: #{tpu_custom_call.1} parent=5 // pred_fallthru
        _
    $region6: #{tpu_custom_call.1} parent=1 // loop_footer
      %s19 = sadd.s32 1, %s15
    $region7: #{tpu_custom_call.1} parent=1 // loop_footer_branch
      %14 = sbr.rel target = $region3
    $region8: #{tpu_custom_call.1} parent=1 // loop_exit
      _
    %575 = vsyncpa [#allocation4], 1
    %s576 = scalar_lea.sflag [#allocation4], 1
    %577 = vsyncpa %s576, 1
    %578 = vsyncpa [#allocation6], 1
    %s579 = scalar_lea.sflag [#allocation6], 1
    %580 = vsyncpa %s579, 1

</llo_original>
